<compile_context>
chip_gen: v6e
topology: v6e:2x2x1
jax: 0.10.0
libtpu: 0.0.40
codegen_flags: <defaults>
</compile_context>

<pallas_src>
import functools

import jax
import jax.numpy as jnp
from jax.experimental import pallas as pl
from jax.experimental.pallas import tpu as pltpu


def _bce_dice_kernel(*refs, from_logits, has_mask):
    """Grid = (N, spatial_tiles); each input block is (1, C, TCOL).

    Scratch acc rows: 0 = bce sum over C, 1 = sum(p0*t0), 2 = sum(p0), 3 = sum(t0).
    Output block (1, 8, 128): row-sums of acc broadcast across lanes.
    """
    if has_mask:
        pred_ref, true_ref, mask_ref, out_ref, acc = refs
    else:
        pred_ref, true_ref, out_ref, acc = refs

    j = pl.program_id(1)

    @pl.when(j == 0)
    def _init():
        acc[...] = jnp.zeros_like(acc)

    x = pred_ref[0].astype(jnp.float32)   # (C, TCOL)
    t = true_ref[0].astype(jnp.float32)   # (C, TCOL)

    if has_mask:
        m = mask_ref[0].astype(jnp.float32)
        p = (jax.nn.sigmoid(x) if from_logits else x) * m
        log_p = jnp.maximum(jnp.log(p), -100.0)          # BCELoss clamps at -100
        log_1mp = jnp.maximum(jnp.log(1.0 - p), -100.0)
        p0 = p[0:1, :]
    elif from_logits:
        # Stable fused sigmoid+BCE: log p = -softplus(-x), log(1-p) = -softplus(x).
        sp_pos = jnp.maximum(x, 0.0) + jnp.log1p(jnp.exp(-jnp.abs(x)))  # softplus(x)
        log_p = jnp.maximum(x - sp_pos, -100.0)
        log_1mp = jnp.maximum(-sp_pos, -100.0)
        p0 = jax.nn.sigmoid(x[0:1, :])                    # channel-0 only (dice)
    else:
        p = x
        log_p = jnp.maximum(jnp.log(p), -100.0)
        log_1mp = jnp.maximum(jnp.log(1.0 - p), -100.0)
        p0 = p[0:1, :]

    # Per-element BCE term, reduced over the channel (sublane) axis inside the
    # tile (XLU has slack) -> accumulate a single row instead of a full-tile RMW.
    bce_elem = -(t * (log_p - log_1mp) + log_1mp)
    bce_row = jnp.sum(bce_elem, axis=0, keepdims=True)    # (1, TCOL)

    t0 = t[0:1, :]
    update = jnp.concatenate([bce_row, p0 * t0, p0, t0], axis=0)  # (4, TCOL)
    acc[0:4, :] += update

    @pl.when(j == pl.num_programs(1) - 1)
    def _finalize():
        row_sums = jnp.sum(acc[...], axis=1, keepdims=True)       # (8, 1)
        out_ref[...] = jnp.broadcast_to(row_sums, (1, 8, 128))


def _pick_col_tile(num_cols, num_ch, itemsize,
                   in_budget_bytes=4 << 20, acc_budget_bytes=8 << 20):
    """Largest multiple of 128 dividing num_cols such that one (C, tcol) input
    tile fits in_budget and the (8, tcol) f32 accumulator fits acc_budget."""
    max_cols = min(in_budget_bytes // max(1, num_ch * itemsize),
                   acc_budget_bytes // 32)
    max_cols = max(128, (max_cols // 128) * 128)
    if num_cols <= max_cols:
        return num_cols
    best = 128
    t = 256
    while t <= max_cols:
        if num_cols % t == 0:
            best = t
        t += 128
    return best


def bce_dice_loss2(y_pred, y_true, alpha=1.0, beta=1.0,
                   sigmoid_required=False, mask=None):
    """JAX/Pallas equivalent of BCE_Dice_Loss2.forward."""
    assert y_pred.shape == y_true.shape
    N, C, H, W = y_pred.shape
    L = H * W
    n_total = N * C * L                      # real element count for the BCE mean
    from_logits = bool(sigmoid_required)
    has_mask = mask is not None

    pred3d = y_pred.reshape(N, C, L)
    true3d = y_true.reshape(N, C, L)
    operands = [pred3d, true3d]
    if has_mask:
        operands.append(jnp.broadcast_to(mask, y_pred.shape).reshape(N, C, L))

    # Pad the spatial axis to a multiple of 128 (padding contributes exactly 0 to
    # the BCE sum and to all three dice sums; n_total keeps the real count).
    L_pad = ((L + 127) // 128) * 128
    if L_pad != L:
        pad = L_pad - L
        pred_fill = -jnp.inf if (from_logits and not has_mask) else 0.0
        fills = [pred_fill, 0.0] + ([0.0] if has_mask else [])
        operands = [jnp.pad(op, ((0, 0), (0, 0), (0, pad)), constant_values=f)
                    for op, f in zip(operands, fills)]

    itemsize = max(jnp.dtype(op.dtype).itemsize for op in operands)
    tcol = _pick_col_tile(L_pad, C, itemsize)
    grid = (N, L_pad // tcol)

    kernel = functools.partial(_bce_dice_kernel,
                               from_logits=from_logits, has_mask=has_mask)

    tile_spec = pl.BlockSpec((1, C, tcol), lambda n, j: (n, 0, j))
    in_specs = [tile_spec] * len(operands)

    tile_bytes = C * tcol * itemsize
    vmem_need = (len(operands) * 2 * tile_bytes   # double-buffered input tiles
                 + 8 * tcol * 4                   # (8, tcol) f32 accumulator
                 + (4 << 20))                     # headroom for compiler temps
    vmem_limit = int(min(max(vmem_need, 16 << 20), 48 << 20))

    n_elem = N * C * L_pad
    cost = pl.CostEstimate(
        flops=10 * n_elem,
        transcendentals=(3 if (from_logits or has_mask) else 2) * n_elem,
        bytes_accessed=sum(int(op.size) * jnp.dtype(op.dtype).itemsize
                           for op in operands) + N * 8 * 128 * 4)

    partials = pl.pallas_call(
        kernel,
        out_shape=jax.ShapeDtypeStruct((N, 8, 128), jnp.float32),
        grid=grid,
        in_specs=in_specs,
        out_specs=pl.BlockSpec((1, 8, 128), lambda n, j: (n, 0, 0)),
        scratch_shapes=[pltpu.VMEM((8, tcol), jnp.float32)],
        compiler_params=pltpu.CompilerParams(
            dimension_semantics=("parallel", "arbitrary"),
            vmem_limit_bytes=vmem_limit),
        cost_estimate=cost,
    )(*operands)

    # Tiny final reduction (N x 4 values) + scalar loss math in plain JAX.
    sums = jnp.sum(partials[:, :4, 0], axis=0)               # (4,)
    bce = sums[0] / jnp.float32(n_total)
    dsc = (2.0 * sums[1] + 1.0) / (sums[2] + sums[3] + 1.0)
    return (alpha * bce + beta * (1.0 - dsc)).astype(jnp.float32)


def _reference(y_pred, y_true, alpha=1.0, beta=1.0, sigmoid_required=False,
               mask=None):
    p = y_pred.astype(jnp.float32)
    if sigmoid_required:
        p = jax.nn.sigmoid(p)
    if mask is not None:
        p = p * mask.astype(jnp.float32)
    t = y_true.astype(jnp.float32)
    bce = jnp.mean(-(t * jnp.maximum(jnp.log(p), -100.0)
                     + (1.0 - t) * jnp.maximum(jnp.log(1.0 - p), -100.0)))
    p0 = p[:, 0].reshape(-1)
    t0 = t[:, 0].reshape(-1)
    inter = jnp.sum(p0 * t0)
    dsc = (2.0 * inter + 1.0) / (jnp.sum(p0) + jnp.sum(t0) + 1.0)
    return alpha * bce + beta * (1.0 - dsc)


if __name__ == "__main__":
    key = jax.random.PRNGKey(0)
    k1, k2, k3, k4 = jax.random.split(key, 4)

    N, C, H, W = 2, 4, 16, 16
    # Probabilities strictly inside (0,1) (nn.BCELoss expects probabilities).
    y_prob = jax.random.uniform(k1, (N, C, H, W), dtype=jnp.float32,
                                minval=0.01, maxval=0.99)
    y_true = jax.random.bernoulli(k2, p=0.5, shape=(N, C, H, W)).astype(jnp.float32)
    logits = jax.random.normal(k3, (N, C, H, W), dtype=jnp.float32) * 2.0
    soft_mask = jax.random.uniform(k4, (N, C, H, W), dtype=jnp.float32,
                                   minval=0.5, maxval=1.0)

    # 1) Plain probabilities (default module config).
    loss = bce_dice_loss2(y_prob, y_true, alpha=1.0, beta=1.0)
    jax.block_until_ready(loss)
    ref = _reference(y_prob, y_true)
    assert jnp.abs(loss - ref) < 1e-4, (loss, ref)

    # 2) Fused sigmoid path (sigmoid_required=True).
    loss_s = bce_dice_loss2(logits, y_true, sigmoid_required=True)
    jax.block_until_ready(loss_s)
    ref_s = _reference(logits, y_true, sigmoid_required=True)
    assert jnp.abs(loss_s - ref_s) < 1e-3, (loss_s, ref_s)

    # 3) Fused sigmoid + mask path (mask streamed into the kernel).
    loss_m = bce_dice_loss2(logits, y_true, sigmoid_required=True, mask=soft_mask)
    jax.block_until_ready(loss_m)
    ref_m = _reference(logits, y_true, sigmoid_required=True, mask=soft_mask)
    assert jnp.abs(loss_m - ref_m) < 1e-3, (loss_m, ref_m)

    print("KERNEL_OK")
</pallas_src>

<mosaic_0001>
module attributes {stable_mosaic.version = 11 : i64} {
  func.func @_bce_dice_kernel(%arg0: i32, %arg1: i32, %arg2: memref<1x4x256xf32, #tpu.memory_space<vmem>>, %arg3: memref<1x4x256xf32, #tpu.memory_space<vmem>>, %arg4: memref<1x8x128xf32, #tpu.memory_space<vmem>>, %arg5: memref<8x256xf32, #tpu.memory_space<vmem>>) attributes {dimension_semantics = [#tpu.dimension_semantics<parallel>, #tpu.dimension_semantics<arbitrary>], iteration_bounds = array<i64: 2, 1>, scalar_prefetch = 0 : i64, scratch_operands = 1 : i64, tpu.core_type = #tpu.core_type<tc>, window_params = [{transform_indices = @transform_0, window_bounds = array<i64: 1, 4, 256>}, {transform_indices = @transform_1, window_bounds = array<i64: 1, 4, 256>}, {transform_indices = @transform_2, window_bounds = array<i64: 1, 8, 128>}]} {
    %c0_i32 = arith.constant 0 : i32
    %0 = arith.cmpi eq, %arg1, %c0_i32 : i32
    %1 = arith.extui %0 : i1 to i32
    %c0_i32_0 = arith.constant 0 : i32
    %2 = arith.cmpi ne, %1, %c0_i32_0 : i32
    scf.if %2 {
      %cst_16 = arith.constant 0.000000e+00 : f32
      %32 = vector.broadcast %cst_16 : f32 to vector<8x256xf32>
      %c0_17 = arith.constant 0 : index
      %c0_18 = arith.constant 0 : index
      %33 = vector.load %arg5[%c0_17, %c0_18] : memref<8x256xf32, #tpu.memory_space<vmem>>, vector<8x256xf32>
      tpu.vector_store %arg5[%c0_17, %c0_18], %32 {strides = array<i32>} : memref<8x256xf32, #tpu.memory_space<vmem>>, vector<8x256xf32>,
    } else {
    }
    %c0 = arith.constant 0 : index
    %c0_1 = arith.constant 0 : index
    %c0_2 = arith.constant 0 : index
    %3 = vector.load %arg2[%c0, %c0_1, %c0_2] : memref<1x4x256xf32, #tpu.memory_space<vmem>>, vector<1x4x256xf32>
    %4 = vector.shape_cast %3 : vector<1x4x256xf32> to vector<4x256xf32>
    %c0_3 = arith.constant 0 : index
    %c0_4 = arith.constant 0 : index
    %c0_5 = arith.constant 0 : index
    %5 = vector.load %arg3[%c0_3, %c0_4, %c0_5] : memref<1x4x256xf32, #tpu.memory_space<vmem>>, vector<1x4x256xf32>
    %6 = vector.shape_cast %5 : vector<1x4x256xf32> to vector<4x256xf32>
    %7 = math.log %4 : vector<4x256xf32>
    %cst = arith.constant -1.000000e+02 : f32
    %8 = vector.broadcast %cst : f32 to vector<4x256xf32>
    %9 = arith.maximumf %7, %8 : vector<4x256xf32>
    %cst_6 = arith.constant 1.000000e+00 : f32
    %10 = vector.broadcast %cst_6 : f32 to vector<4x256xf32>
    %11 = arith.subf %10, %4 : vector<4x256xf32>
    %12 = math.log %11 : vector<4x256xf32>
    %cst_7 = arith.constant -1.000000e+02 : f32
    %13 = vector.broadcast %cst_7 : f32 to vector<4x256xf32>
    %14 = arith.maximumf %12, %13 : vector<4x256xf32>
    %15 = vector.extract_strided_slice %4 {offsets = [0, 0], sizes = [1, 256], strides = [1, 1]} : vector<4x256xf32> to vector<1x256xf32>
    %16 = arith.subf %9, %14 : vector<4x256xf32>
    %17 = arith.mulf %6, %16 : vector<4x256xf32>
    %18 = arith.addf %17, %14 : vector<4x256xf32>
    %cst_8 = arith.constant 0.000000e+00 : f32
    %19 = vector.broadcast %cst_8 : f32 to vector<4x256xf32>
    %20 = arith.subf %19, %18 : vector<4x256xf32>
    %cst_9 = arith.constant dense<0.000000e+00> : vector<256xf32>
    %21 = vector.multi_reduction <add>, %20, %cst_9 [0] : vector<4x256xf32> to vector<256xf32>
    %22 = vector.shape_cast %21 : vector<256xf32> to vector<1x256xf32>
    %23 = vector.extract_strided_slice %6 {offsets = [0, 0], sizes = [1, 256], strides = [1, 1]} : vector<4x256xf32> to vector<1x256xf32>
    %24 = arith.mulf %15, %23 : vector<1x256xf32>
    %25 = tpu.concatenate %22, %24, %15, %23 in 0 : vector<1x256xf32>, vector<1x256xf32>, vector<1x256xf32>, vector<1x256xf32> -> vector<4x256xf32>
    %c0_10 = arith.constant 0 : index
    %c0_11 = arith.constant 0 : index
    %26 = vector.load %arg5[%c0_10, %c0_11] : memref<8x256xf32, #tpu.memory_space<vmem>>, vector<4x256xf32>
    %27 = arith.addf %26, %25 : vector<4x256xf32>
    %c0_12 = arith.constant 0 : index
    %c0_13 = arith.constant 0 : index
    %28 = vector.load %arg5[%c0_12, %c0_13] : memref<8x256xf32, #tpu.memory_space<vmem>>, vector<4x256xf32>
    tpu.vector_store %arg5[%c0_12, %c0_13], %27 {strides = array<i32>} : memref<8x256xf32, #tpu.memory_space<vmem>>, vector<4x256xf32>,
    %c0_i32_14 = arith.constant 0 : i32
    %29 = arith.cmpi eq, %arg1, %c0_i32_14 : i32
    %30 = arith.extui %29 : i1 to i32
    %c0_i32_15 = arith.constant 0 : i32
    %31 = arith.cmpi ne, %30, %c0_i32_15 : i32
    scf.if %31 {
      %c0_16 = arith.constant 0 : index
      %c0_17 = arith.constant 0 : index
      %32 = vector.load %arg5[%c0_16, %c0_17] : memref<8x256xf32, #tpu.memory_space<vmem>>, vector<8x256xf32>
      %cst_18 = arith.constant dense<0.000000e+00> : vector<8xf32>
      %33 = vector.multi_reduction <add>, %32, %cst_18 [1] : vector<8x256xf32> to vector<8xf32>
      %34 = vector.shape_cast %33 : vector<8xf32> to vector<8x1xf32>
      %35 = vector.shape_cast %34 : vector<8x1xf32> to vector<1x8x1xf32>
      %36 = vector.broadcast %35 : vector<1x8x1xf32> to vector<1x8x128xf32>
      %c0_19 = arith.constant 0 : index
      %c0_20 = arith.constant 0 : index
      %c0_21 = arith.constant 0 : index
      %37 = vector.load %arg4[%c0_19, %c0_20, %c0_21] : memref<1x8x128xf32, #tpu.memory_space<vmem>>, vector<1x8x128xf32>
      tpu.vector_store %arg4[%c0_19, %c0_20, %c0_21], %36 {strides = array<i32>} : memref<1x8x128xf32, #tpu.memory_space<vmem>>, vector<1x8x128xf32>,
    } else {
    }
    return
  }
  func.func @transform_0(%arg0: i32, %arg1: i32) -> (i32, i32, i32) {
    %c0_i32 = arith.constant 0 : i32
    %c0_i32_0 = arith.constant 0 : i32
    return %arg0, %c0_i32, %arg1 : i32, i32, i32
  }
  func.func @transform_1(%arg0: i32, %arg1: i32) -> (i32, i32, i32) {
    %c0_i32 = arith.constant 0 : i32
    %c0_i32_0 = arith.constant 0 : i32
    return %arg0, %c0_i32, %arg1 : i32, i32, i32
  }
  func.func @transform_2(%arg0: i32, %arg1: i32) -> (i32, i32, i32) {
    %c0_i32 = arith.constant 0 : i32
    %c0_i32_0 = arith.constant 0 : i32
    %c0_i32_1 = arith.constant 0 : i32
    return %arg0, %c0_i32, %c0_i32_0 : i32, i32, i32
  }
}

</mosaic_0001>

<llo_original>
// kernel: tpu_custom_call.1
$region0: #{tpu_custom_call.1}
  #allocation0 [shape = 'u32[]', space=smem, size = 0x4, offset = 0x4, fixed_abs, tag = 'smem constant byte address 0x4 - core index']
  #allocation1 [shape = 'u32[144,128]{1,0:T(1,128)}', space=vmem, size = 0x12000, scoped, tag = 'internal scratch']
  #allocation2 [shape = 'f32[8,256]{1,0:T(8,128)}', space=vmem, size = 0x2000, scoped, tag = 'scratch operand']
  %s0 = inlined_call_operand.hbm [shape: f32[2,4,256], index: 0, kind: input, shape index: {}]
  %s1 = inlined_call_operand.hbm [shape: f32[2,4,256], index: 1, kind: input, shape index: {}]
  %s2 = inlined_call_operand.hbm [shape: f32[2,8,128], index: 2, kind: output, shape index: {}]
  %s3 = sld [smem:[#allocation0]]
  $region57: #{tpu_custom_call.1} parent=0
    _
  %s5 = ssub.s32 1, %s3
  %s6 = scalar_select 0, %s5, %s3
  $region1: #{tpu_custom_call.1} parent=0
    #allocation3 [shape = 'u8[8192]{0}', space=vmem, size = 0x2000, scoped, tag = 'input window, operand 0']
    #allocation4 [shape = 's32[2]{0}', space=sflag, size = 0x8, scoped, tag = 'scoped memory for tpu_custom_call.1']
    #allocation5 [shape = 's32[2]{0}', space=sflag, size = 0x8, scoped, tag = 'scoped memory for tpu_custom_call.1']
    #allocation6 [shape = 'u8[8192]{0}', space=vmem, size = 0x2000, scoped, tag = 'input window, operand 1']
    #allocation7 [shape = 's32[2]{0}', space=sflag, size = 0x8, scoped, tag = 'scoped memory for tpu_custom_call.1']
    #allocation8 [shape = 'u8[8192]{0}', space=vmem, size = 0x2000, scoped, tag = 'output window, operand 0']
    %7 = vsyncpa [#allocation4], 0
    %s8 = scalar_lea.sflag [#allocation4], 1
    %9 = vsyncpa %s8, 0
    %10 = vsyncpa [#allocation7], 0
    %s11 = scalar_lea.sflag [#allocation7], 1
    %12 = vsyncpa %s11, 0
    %13 = vsyncpa [#allocation5], 0
    %s14 = scalar_lea.sflag [#allocation5], 1
    %15 = vsyncpa %s14, 0
    loop: start=0, step=1, limit=4
    $region2: #{tpu_custom_call.1} parent=1 // loop_pre_header
      _
    $region3: #{tpu_custom_call.1} parent=1 // loop_header
      %s17 = sphi 0, %s21
      %p18 = scmp.ge.s32.totalorder %s17, 4
      %s24 = sphi 0, %s36
      %s25 = sphi 0, %s32
      %s26 = sphi 0, %s24
      %s27 = sphi 0, %s25
      %s28 = sphi 0, %s26
      %s29 = sphi 0, %s27
      %s41 = sphi 0, %s43
      %s44 = sphi 0, %s41
      %s45 = sphi 0, %s44
      %s61 = sphi 0, %s45
      %s69 = sphi 0, %s71
      %s72 = sphi 0, %s69
      %s73 = sphi 0, %s72
      %s89 = sphi 0, %s73
      %s95 = sphi 0, %s97
      %s98 = sphi 0, %s95
      %s99 = sphi 0, %s98
      %s115 = sphi 0, %s99
    $region4: #{tpu_custom_call.1} parent=1 // loop_header_branch
      %20 = sbr.rel (%p18) target = $region8
    $region5: #{tpu_custom_call.1} parent=1 // loop_body
      %s22 = ssub.s32 %s17, 1
      %s23 = ssub.s32 %s17, 2
      %s30 = sadd.s32 1, %s25
      %p31 = scmp.ge.s32.totalorder %s30, 1
      %s32 = scalar_select %p31, 0, %s30
      %s33 = sadd.s32 1, %s24
      %s34 = scalar_select %p31, %s33, %s24
      %p35 = scmp.ge.s32.totalorder %s34, 2
      %s36 = scalar_select %p35, 0, %s34
      %s37 = ssub.s32 %s24, %s36
      %s38 = ssub.s32 %s25, %s32
      %s39 = sor.u32 %s37, %s38
      %p40 = scmp.eq.s32.totalorder %s39, 0
      %s42 = sadd.s32 %s41, 1
      %s43 = scalar_select %p40, %s41, %s42
      %p46 = pneg %p40
      %p47 = scmp.eq.s32.totalorder %s17, 1
      %p48 = por %p46, %p47
      %p49 = scmp.ne.s32.totalorder %s41, %s44
      %p50 = scmp.eq.s32.totalorder %s17, 0
      %p51 = por %p49, %p50
      %p52 = scmp.ne.s32.totalorder %s41, %s44
      %p53 = scmp.eq.s32.totalorder %s22, 1
      %p54 = por %p52, %p53
      %p55 = scmp.ne.s32.totalorder %s44, %s45
      %p56 = scmp.eq.s32.totalorder %s22, 0
      %p57 = por %p55, %p56
      %p58 = scmp.ne.s32.totalorder %s44, %s45
      %p59 = scmp.eq.s32.totalorder %s23, 1
      %p60 = por %p58, %p59
      %p62 = scmp.ne.s32.totalorder %s45, %s61
      %p63 = scmp.eq.s32.totalorder %s23, 0
      %p64 = por %p62, %p63
      %s65 = ssub.s32 %s24, %s36
      %s66 = ssub.s32 %s25, %s32
      %s67 = sor.u32 %s65, %s66
      %p68 = scmp.eq.s32.totalorder %s67, 0
      %s70 = sadd.s32 %s69, 1
      %s71 = scalar_select %p68, %s69, %s70
      %p74 = pneg %p68
      %p75 = scmp.eq.s32.totalorder %s17, 1
      %p76 = por %p74, %p75
      %p77 = scmp.ne.s32.totalorder %s69, %s72
      %p78 = scmp.eq.s32.totalorder %s17, 0
      %p79 = por %p77, %p78
      %p80 = scmp.ne.s32.totalorder %s69, %s72
      %p81 = scmp.eq.s32.totalorder %s22, 1
      %p82 = por %p80, %p81
      %p83 = scmp.ne.s32.totalorder %s72, %s73
      %p84 = scmp.eq.s32.totalorder %s22, 0
      %p85 = por %p83, %p84
      %p86 = scmp.ne.s32.totalorder %s72, %s73
      %p87 = scmp.eq.s32.totalorder %s23, 1
      %p88 = por %p86, %p87
      %p90 = scmp.ne.s32.totalorder %s73, %s89
      %p91 = scmp.eq.s32.totalorder %s23, 0
      %p92 = por %p90, %p91
      %s93 = ssub.s32 %s24, %s36
      %p94 = scmp.eq.s32.totalorder %s93, 0
      %s96 = sadd.s32 %s95, 1
      %s97 = scalar_select %p94, %s95, %s96
      %p100 = pneg %p94
      %p101 = scmp.eq.s32.totalorder %s17, 1
      %p102 = por %p100, %p101
      %p103 = scmp.ne.s32.totalorder %s95, %s98
      %p104 = scmp.eq.s32.totalorder %s17, 0
      %p105 = por %p103, %p104
      %p106 = scmp.ne.s32.totalorder %s95, %s98
      %p107 = scmp.eq.s32.totalorder %s22, 1
      %p108 = por %p106, %p107
      %p109 = scmp.ne.s32.totalorder %s98, %s99
      %p110 = scmp.eq.s32.totalorder %s22, 0
      %p111 = por %p109, %p110
      %p112 = scmp.ne.s32.totalorder %s98, %s99
      %p113 = scmp.eq.s32.totalorder %s23, 1
      %p114 = por %p112, %p113
      %p116 = scmp.ne.s32.totalorder %s99, %s115
      %p117 = scmp.eq.s32.totalorder %s23, 0
      %p118 = por %p116, %p117
      %p119 = scmp.le.s32.totalorder 1, %s17
      %p120 = scmp.lt.s32.totalorder %s17, 3
      %p121 = pnand %p119, %p120
      %p122 = pneg %p121
      // Predicated region
      $region9: #{tpu_custom_call.1} parent=5 // pred_check
        _
      $region10: #{tpu_custom_call.1} parent=5 // pred_check_branch
        %124 = sbr.rel (%p121) target = $region12
      $region11: #{tpu_custom_call.1} parent=5 // pred_region
        %s125 = ssub.s32 %s17, 1
      $region12: #{tpu_custom_call.1} parent=5 // pred_fallthru
        _
      %p126 = scmp.lt.s32.totalorder %s17, 2
      // Predicated region
      $region13: #{tpu_custom_call.1} parent=5 // pred_check
        %p127 = pneg %p126
      $region14: #{tpu_custom_call.1} parent=5 // pred_check_branch
        %129 = sbr.rel (%p127) target = $region16
      $region15: #{tpu_custom_call.1} parent=5 // pred_region
        // Predicated region
        $region17: #{tpu_custom_call.1} parent=15 // pred_check
          %p130 = pneg %p51
        $region18: #{tpu_custom_call.1} parent=15 // pred_check_branch
          %132 = sbr.rel (%p130) target = $region20
        $region19: #{tpu_custom_call.1} parent=15 // pred_region
          %s133 = sand.u32 %s41, 1
          %s134 = scalar_lea.sflag [#allocation4], %s133
          %s135 = sand.u32 %s41, 1
          %s136 = smul.addr %s135, 8
          %s137 = scalar_lea.vmem [#allocation3], %s136
          %s138 = smul.u32 2, %s25
          %s140 = ssub.s32 128, 128
          %141 = vsyncadd %s134, %s140
          %s142 = smul.addr %s24, 2
          %s143 = sadd.s32 %s138, %s142
          %s144 = smul.addr %s143, 64
          %s145 = scalar_lea.hbm %s0, %s144
          %s147 = sshll.u32 %s137, 4
          %s148 = int_to_ptr.vmem [resolvable:$true] %s147
          %150 = dma.hbm_to_vmem [thread:$0]  %s145, 128, %s148, %s134
        $region20: #{tpu_custom_call.1} parent=15 // pred_fallthru
          _
        // Predicated region
        $region21: #{tpu_custom_call.1} parent=15 // pred_check
          %p151 = pneg %p79
        $region22: #{tpu_custom_call.1} parent=15 // pred_check_branch
          %153 = sbr.rel (%p151) target = $region24
        $region23: #{tpu_custom_call.1} parent=15 // pred_region
          %s154 = sand.u32 %s69, 1
          %s155 = scalar_lea.sflag [#allocation7], %s154
          %s156 = sand.u32 %s69, 1
          %s157 = smul.addr %s156, 8
          %s158 = scalar_lea.vmem [#allocation6], %s157
          %s159 = smul.u32 2, %s25
          %s161 = ssub.s32 128, 128
          %162 = vsyncadd %s155, %s161
          %s163 = smul.addr %s24, 2
          %s164 = sadd.s32 %s159, %s163
          %s165 = smul.addr %s164, 64
          %s166 = scalar_lea.hbm %s1, %s165
          %s168 = sshll.u32 %s158, 4
          %s169 = int_to_ptr.vmem [resolvable:$true] %s168
          %171 = dma.hbm_to_vmem [thread:$0]  %s166, 128, %s169, %s155
        $region24: #{tpu_custom_call.1} parent=15 // pred_fallthru
          _
      $region16: #{tpu_custom_call.1} parent=5 // pred_fallthru
        _
      %p172 = scmp.le.s32.totalorder 1, %s17
      %p173 = scmp.lt.s32.totalorder %s17, 3
      %p174 = pnand %p172, %p173
      %p175 = pneg %p174
      // Predicated region
      $region25: #{tpu_custom_call.1} parent=5 // pred_check
        _
      $region26: #{tpu_custom_call.1} parent=5 // pred_check_branch
        %177 = sbr.rel (%p174) target = $region28
      $region27: #{tpu_custom_call.1} parent=5 // pred_region
        %s178 = ssub.s32 %s17, 1
        %s179 = sand.u32 %s44, 1
        %s180 = scalar_lea.sflag [#allocation4], %s179
        %s181 = sand.u32 %s44, 1
        %s182 = smul.addr %s181, 8
        %s183 = scalar_lea.vmem [#allocation3], %s182
        // Predicated region
        $region29: #{tpu_custom_call.1} parent=27 // pred_check
          %p184 = pneg %p57
        $region30: #{tpu_custom_call.1} parent=27 // pred_check_branch
          %186 = sbr.rel (%p184) target = $region32
        $region31: #{tpu_custom_call.1} parent=27 // pred_region
          %187 = dma.done %s180, 128
        $region32: #{tpu_custom_call.1} parent=27 // pred_fallthru
          _
        %s188 = sand.u32 %s72, 1
        %s189 = scalar_lea.sflag [#allocation7], %s188
        %s190 = sand.u32 %s72, 1
        %s191 = smul.addr %s190, 8
        %s192 = scalar_lea.vmem [#allocation6], %s191
        // Predicated region
        $region33: #{tpu_custom_call.1} parent=27 // pred_check
          %p193 = pneg %p85
        $region34: #{tpu_custom_call.1} parent=27 // pred_check_branch
          %195 = sbr.rel (%p193) target = $region36
        $region35: #{tpu_custom_call.1} parent=27 // pred_region
          %196 = dma.done %s189, 128
        $region36: #{tpu_custom_call.1} parent=27 // pred_fallthru
          _
        %s197 = sand.u32 %s44, 1
        %s198 = scalar_lea.sflag [#allocation4], %s197
        %s199 = sand.u32 %s44, 1
        %s200 = smul.addr %s199, 8
        %s201 = scalar_lea.vmem [#allocation3], %s200
        %p202 = pneg %p57
        %p203 = pneg %p54
        %s204 = sand.u32 %s72, 1
        %s205 = scalar_lea.sflag [#allocation7], %s204
        %s206 = sand.u32 %s72, 1
        %s207 = smul.addr %s206, 8
        %s208 = scalar_lea.vmem [#allocation6], %s207
        %p209 = pneg %p85
        %p210 = pneg %p82
        %p211 = pneg %p111
        %p212 = pneg %p108
        %s213 = sand.u32 %s98, 1
        %s214 = scalar_lea.sflag [#allocation5], %s213
        %s215 = sand.u32 %s98, 1
        %s216 = smul.addr %s215, 8
        %s217 = scalar_lea.vmem [#allocation8], %s216
        %s218 = smul.u32 2, %s27
        %s219 = smul.u32 2, %s27
        %p220 = scmp.eq.s32.totalorder %s27, 0
        // Predicated region
        $region37: #{tpu_custom_call.1} parent=27 // pred_check
          %p221 = pneg %p220
        $region38: #{tpu_custom_call.1} parent=27 // pred_check_branch
          %223 = sbr.rel (%p221) target = $region40
        $region39: #{tpu_custom_call.1} parent=27 // pred_region
          %224 = vst [vmem:[#allocation2] sm:$0xff] 0.0
          %225 = vst [vmem:[#allocation2 + $0x8] sm:$0xff] 0.0
        $region40: #{tpu_custom_call.1} parent=27 // pred_fallthru
          _
        %v226 = vld [vmem:[%s183] sm:$0xff]
        %v227 = vld [vmem:[%s192] sm:$0xff]
        %v228 = vlog2.pop %v226
        %v229 = vmul.f32 %v228, 0.6931472
        %v230 = vmax.f32 %v229, -100.0
        %v231 = vsub.f32 1.0, %v226
        %v232 = vlog2.pop %v231
        %v233 = vmul.f32 %v232, 0.6931472
        %v234 = vmax.f32 %v233, -100.0
        %v235 = vsub.f32 %v230, %v234
        %v236 = vmul.f32 %v227, %v235
        %v237 = vadd.f32 %v236, %v234
        %v238 = vsub.f32 0.0, %v237
        %v240 = vcombine.high %v238, %v238
        %vm242 = vcmask 1043456
        %v243 = vsel %vm242, %v238, 0.0
        %v244 = vrot.slane %v243, 4
        %v245 = vadd.f32 %v243, %v244
        %v246 = vrot.slane %v245, 2
        %v247 = vadd.f32 %v245, %v246
        %v248 = vrot.slane %v247, 1
        %v249 = vadd.f32 %v247, %v248
        %v250 = vsel %vm242, %v240, 0.0
        %v251 = vrot.slane %v250, 4
        %v252 = vadd.f32 %v250, %v251
        %v253 = vrot.slane %v252, 2
        %v254 = vadd.f32 %v252, %v253
        %v255 = vrot.slane %v254, 1
        %v256 = vadd.f32 %v254, %v255
        %v257 = vmul.f32 %v226, %v227
        %v259 = vlaneseq
        %v260 = vshrl.u32 %v259, 7
        %v261 = vsub.s32 0, %v260
        %v262 = vrot.slane %v257, %v261
        %v263 = vlaneseq
        %v264 = vshrl.u32 %v263, 7
        %v265 = vsub.s32 4, %v264
        %v266 = vrot.slane %v257, %v265
        %v270 = vlaneseq
        %v271 = vshrl.u32 %v270, 7
        %v272 = vsub.s32 0, %v271
        %v273 = vrot.slane %v226, %v272
        %v274 = vlaneseq
        %v275 = vshrl.u32 %v274, 7
        %v276 = vsub.s32 4, %v275
        %v277 = vrot.slane %v226, %v276
        %v281 = vlaneseq
        %v282 = vshrl.u32 %v281, 7
        %v283 = vsub.s32 0, %v282
        %v284 = vrot.slane %v227, %v283
        %v285 = vlaneseq
        %v286 = vshrl.u32 %v285, 7
        %v287 = vsub.s32 4, %v286
        %v288 = vrot.slane %v227, %v287
        %vm291 = vcmask 1040384
        %v292 = vsel %vm291, %v249, %v262
        %v293 = vsel %vm291, %v256, %v266
        %vm294 = vcmask 1041408
        %v295 = vsel %vm294, %v292, %v273
        %v296 = vsel %vm294, %v293, %v277
        %vm297 = vcmask 1042432
        %v298 = vsel %vm297, %v295, %v284
        %v299 = vsel %vm297, %v296, %v288
        %v300 = vld [vmem:[#allocation2] sm:$0xf]
        %v301 = vld [vmem:[#allocation2 + $0x8] sm:$0xf]
        %v302 = vadd.f32 %v300, %v298
        %v303 = vadd.f32 %v301, %v299
        %304 = vst [vmem:[#allocation2] sm:$0xf] %v302
        %305 = vst [vmem:[#allocation2 + $0x8] sm:$0xf] %v303
        // Predicated region
        $region41: #{tpu_custom_call.1} parent=27 // pred_check
          %p306 = pneg %p220
        $region42: #{tpu_custom_call.1} parent=27 // pred_check_branch
          %308 = sbr.rel (%p306) target = $region44
        $region43: #{tpu_custom_call.1} parent=27 // pred_region
          %v309 = vld [vmem:[#allocation2] sm:$0xff]
          %v310 = vld [vmem:[#allocation2 + $0x8] sm:$0xff]
          %v311 = vadd.f32 %v309, %v310
          %312 = vadd.xlane.f32.xlu0 %v311
          %v313 = vpop.xlane.xlu0 %312
          %314 = vst [vmem:[%s217] sm:$0xff] %v313
        $region44: #{tpu_custom_call.1} parent=27 // pred_fallthru
          _
        %s315 = sand.u32 %s98, 1
        %s316 = scalar_lea.sflag [#allocation5], %s315
        %s317 = sand.u32 %s98, 1
        %s318 = smul.addr %s317, 8
        %s319 = scalar_lea.vmem [#allocation8], %s318
        // Predicated region
        $region45: #{tpu_custom_call.1} parent=27 // pred_check
          %p320 = pneg %p108
        $region46: #{tpu_custom_call.1} parent=27 // pred_check_branch
          %322 = sbr.rel (%p320) target = $region48
        $region47: #{tpu_custom_call.1} parent=27 // pred_region
          %s324 = ssub.s32 128, 128
          %325 = vsyncadd %s316, %s324
          %s326 = smul.addr %s26, 128
          %s327 = scalar_lea.hbm %s2, %s326
          %s329 = sshll.u32 %s319, 4
          %s330 = int_to_ptr.vmem [resolvable:$true] %s329
          %332 = dma.vmem_to_hbm [thread:$0]  %s330, 128, %s327, %s316
        $region48: #{tpu_custom_call.1} parent=27 // pred_fallthru
          _
      $region28: #{tpu_custom_call.1} parent=5 // pred_fallthru
        _
      %p333 = scmp.le.s32.totalorder 2, %s17
      // Predicated region
      $region49: #{tpu_custom_call.1} parent=5 // pred_check
        %p334 = pneg %p333
      $region50: #{tpu_custom_call.1} parent=5 // pred_check_branch
        %336 = sbr.rel (%p334) target = $region52
      $region51: #{tpu_custom_call.1} parent=5 // pred_region
        %s337 = ssub.s32 %s17, 2
        // Predicated region
        $region53: #{tpu_custom_call.1} parent=51 // pred_check
          %p338 = pneg %p114
        $region54: #{tpu_custom_call.1} parent=51 // pred_check_branch
          %340 = sbr.rel (%p338) target = $region56
        $region55: #{tpu_custom_call.1} parent=51 // pred_region
          %s341 = sand.u32 %s99, 1
          %s342 = scalar_lea.sflag [#allocation5], %s341
          %s343 = sand.u32 %s99, 1
          %s344 = smul.addr %s343, 8
          %s345 = scalar_lea.vmem [#allocation8], %s344
          %346 = dma.done %s342, 128
        $region56: #{tpu_custom_call.1} parent=51 // pred_fallthru
          _
      $region52: #{tpu_custom_call.1} parent=5 // pred_fallthru
        _
    $region6: #{tpu_custom_call.1} parent=1 // loop_footer
      %s21 = sadd.s32 1, %s17
    $region7: #{tpu_custom_call.1} parent=1 // loop_footer_branch
      %16 = sbr.rel target = $region3
    $region8: #{tpu_custom_call.1} parent=1 // loop_exit
      _
    %347 = vsyncpa [#allocation4], 1
    %s348 = scalar_lea.sflag [#allocation4], 1
    %349 = vsyncpa %s348, 1
    %350 = vsyncpa [#allocation7], 1
    %s351 = scalar_lea.sflag [#allocation7], 1
    %352 = vsyncpa %s351, 1
    %353 = vsyncpa [#allocation5], 1
    %s354 = scalar_lea.sflag [#allocation5], 1
    %355 = vsyncpa %s354, 1

</llo_original>
